<compile_context>
chip_gen: v7x
topology: tpu7x:2x2x1
jax: 0.10.0
libtpu: 0.0.40
codegen_flags: <defaults>
</compile_context>

<pallas_src>
import functools

import jax
import jax.numpy as jnp
from jax.experimental import pallas as pl
from jax.experimental.pallas import tpu as pltpu


def _round_up(n: int, m: int) -> int:
    return ((n + m - 1) // m) * m


def _make_mlp_kernel(use_mxu_l1: bool, compute_dtype):
    """Build the kernel body. `use_mxu_l1` / `compute_dtype` are trace-time constants."""

    def kernel(x_ref, w1_ref, b1_ref, w2_ref, b2_ref, o_ref):
        x = x_ref[...]                                   # (bb, K)  float32

        if use_mxu_l1:
            # Layer 1 on the MXU (only worthwhile when K is non-trivial).
            h = jnp.dot(
                x.astype(compute_dtype),
                w1_ref[...].astype(compute_dtype),
                preferred_element_type=jnp.float32,
            )
        else:
            # Tiny K: VPU broadcast multiply-accumulate, skip the MXU entirely.
            k_dim = x_ref.shape[1]
            h = x[:, 0:1].astype(jnp.float32) * w1_ref[0:1, :].astype(jnp.float32)
            for k in range(1, k_dim):  # static unroll (k_dim is tiny)
                h = h + x[:, k : k + 1].astype(jnp.float32) * w1_ref[
                    k : k + 1, :
                ].astype(jnp.float32)

        h = jnp.maximum(h + b1_ref[...].astype(jnp.float32), 0.0)   # (bb, Hp) f32

        # Layer 2 on the MXU: bf16 operands, f32 accumulation.
        out = (
            jnp.dot(h.astype(compute_dtype), w2_ref[...],
                    preferred_element_type=jnp.float32)
            + b2_ref[...].astype(jnp.float32)
        )
        o_ref[...] = out.astype(o_ref.dtype)             # lane-dense (bb, Np) store

    return kernel


@functools.partial(jax.jit, static_argnames=("block_b", "compute_dtype"))
def net_forward(x, w1, b1, w2, b2, *, block_b=512, compute_dtype=jnp.bfloat16):
    """Forward pass of Net: predict(relu(hidden(x))).

    x:  (B, n_feature) float32
    w1: (n_feature, n_hidden)   (transposed PyTorch weight)
    b1: (n_hidden,) or (1, n_hidden)
    w2: (n_hidden, n_output)    (transposed PyTorch weight)
    b2: (n_output,) or (1, n_output)
    returns (B, n_output) in x.dtype
    """
    B, K = x.shape
    Kw, H = w1.shape
    H2, N = w2.shape
    assert Kw == K and H2 == H
    out_dtype = x.dtype

    # Lane-dense padding of hidden/output dims; sublane-aligned batch tile.
    Hp = _round_up(H, 128)
    Np = _round_up(N, 128)
    bb = _round_up(min(block_b, _round_up(B, 8)), 8)
    Bp = _round_up(B, bb)

    # Zero padding is semantically inert:
    #   padded hidden cols -> relu(0 + 0) = 0; padded w2 rows are 0; padded output
    #   lanes / batch rows are sliced off below.
    x_p = jnp.zeros((Bp, K), x.dtype).at[:B, :].set(x)
    w1_p = jnp.zeros((K, Hp), jnp.float32).at[:, :H].set(w1.astype(jnp.float32))
    b1_p = jnp.zeros((1, Hp), jnp.float32).at[:, :H].set(
        b1.reshape(1, H).astype(jnp.float32)
    )
    w2_p = jnp.zeros((Hp, Np), compute_dtype).at[:H, :N].set(w2.astype(compute_dtype))
    b2_p = jnp.zeros((1, Np), jnp.float32).at[:, :N].set(
        b2.reshape(1, N).astype(jnp.float32)
    )

    use_mxu_l1 = K >= 16
    kernel = _make_mlp_kernel(use_mxu_l1, compute_dtype)

    grid = (Bp // bb,)
    out_p = pl.pallas_call(
        kernel,
        out_shape=jax.ShapeDtypeStruct((Bp, Np), out_dtype),
        grid_spec=pltpu.PrefetchScalarGridSpec(
            num_scalar_prefetch=0,
            grid=grid,
            in_specs=[
                pl.BlockSpec((bb, K), lambda i: (i, 0)),   # x: tiled over batch
                pl.BlockSpec((K, Hp), lambda i: (0, 0)),   # w1: VMEM-resident
                pl.BlockSpec((1, Hp), lambda i: (0, 0)),   # b1: VMEM-resident
                pl.BlockSpec((Hp, Np), lambda i: (0, 0)),  # w2: VMEM-resident
                pl.BlockSpec((1, Np), lambda i: (0, 0)),   # b2: VMEM-resident
            ],
            out_specs=pl.BlockSpec((bb, Np), lambda i: (i, 0)),  # lane-dense output
        ),
        compiler_params=pltpu.CompilerParams(
            # batch tiles are independent -> shard across TensorCores (v7x megacore)
            dimension_semantics=("parallel",),
        ),
    )(x_p, w1_p, b1_p, w2_p, b2_p)

    return out_p[:B, :N]


def init_params(key, n_feature=1, n_hidden=10, n_output=1, dtype=jnp.float32):
    """Deterministic init mimicking torch.nn.Linear's U(-1/sqrt(fan_in), 1/sqrt(fan_in))."""
    k1, k2, k3, k4 = jax.random.split(key, 4)
    bound1 = 1.0 / (n_feature ** 0.5)
    bound2 = 1.0 / (n_hidden ** 0.5)
    # stored as (in, out) so the kernel can do x @ W directly
    w1 = jax.random.uniform(k1, (n_feature, n_hidden), dtype, -bound1, bound1)
    b1 = jax.random.uniform(k2, (1, n_hidden), dtype, -bound1, bound1)
    w2 = jax.random.uniform(k3, (n_hidden, n_output), dtype, -bound2, bound2)
    b2 = jax.random.uniform(k4, (1, n_output), dtype, -bound2, bound2)
    return w1, b1, w2, b2


if __name__ == "__main__":
    key = jax.random.PRNGKey(0)
    kx, kp = jax.random.split(key)

    n_feature, n_hidden, n_output = 1, 10, 1
    batch = 50  # deliberately not a multiple of the batch tile -> exercises padding
    x = jax.random.normal(kx, (batch, n_feature), jnp.float32)
    w1, b1, w2, b2 = init_params(kp, n_feature, n_hidden, n_output)

    # small batch tile so the grid actually has several pipelined steps
    out = net_forward(x, w1, b1, w2, b2, block_b=16)
    jax.block_until_ready(out)
    assert out.shape == (batch, n_output)

    # Reference matching kernel numerics: f32 VPU layer-1, bf16-operand / f32-acc layer-2.
    h = jnp.maximum(x * w1 + b1, 0.0)  # (50,1)*(1,10) broadcast == x @ w1 exactly
    ref = (
        jnp.dot(h.astype(jnp.bfloat16), w2.astype(jnp.bfloat16),
                preferred_element_type=jnp.float32)
        + b2
    )
    assert jnp.allclose(out, ref, atol=1e-4, rtol=1e-4), float(
        jnp.max(jnp.abs(out - ref))
    )

    # Looser check against the exact-f32 PyTorch-equivalent forward (bf16 MXU operands).
    ref_f32 = jnp.maximum(x @ w1 + b1, 0.0) @ w2 + b2
    assert jnp.allclose(out, ref_f32, atol=3e-2, rtol=3e-2)

    print("KERNEL_OK")
</pallas_src>

<mosaic_0001>
module attributes {stable_mosaic.version = 11 : i64} {
  func.func @kernel(%arg0: i32, %arg1: memref<16x1xf32, #tpu.memory_space<vmem>>, %arg2: memref<1x128xf32, #tpu.memory_space<vmem>>, %arg3: memref<1x128xf32, #tpu.memory_space<vmem>>, %arg4: memref<128x128xbf16, #tpu.memory_space<vmem>>, %arg5: memref<1x128xf32, #tpu.memory_space<vmem>>, %arg6: memref<16x128xf32, #tpu.memory_space<vmem>>) attributes {dimension_semantics = [#tpu.dimension_semantics<parallel>], iteration_bounds = array<i64: 4>, scalar_prefetch = 0 : i64, scratch_operands = 0 : i64, tpu.core_type = #tpu.core_type<tc>, window_params = [{transform_indices = @transform_0, window_bounds = array<i64: 16, 1>}, {pipeline_mode = #tpu.pipeline_mode<synchronous>, transform_indices = @transform_1, window_bounds = array<i64: 1, 128>}, {pipeline_mode = #tpu.pipeline_mode<synchronous>, transform_indices = @transform_2, window_bounds = array<i64: 1, 128>}, {pipeline_mode = #tpu.pipeline_mode<synchronous>, transform_indices = @transform_3, window_bounds = array<i64: 128, 128>}, {pipeline_mode = #tpu.pipeline_mode<synchronous>, transform_indices = @transform_4, window_bounds = array<i64: 1, 128>}, {transform_indices = @transform_5, window_bounds = array<i64: 16, 128>}]} {
    %c0 = arith.constant 0 : index
    %c0_0 = arith.constant 0 : index
    %0 = vector.load %arg1[%c0, %c0_0] : memref<16x1xf32, #tpu.memory_space<vmem>>, vector<16x1xf32>
    %c0_1 = arith.constant 0 : index
    %c0_2 = arith.constant 0 : index
    %1 = vector.load %arg2[%c0_1, %c0_2] : memref<1x128xf32, #tpu.memory_space<vmem>>, vector<1x128xf32>
    %2 = vector.broadcast %0 : vector<16x1xf32> to vector<16x128xf32>
    %3 = vector.broadcast %1 : vector<1x128xf32> to vector<16x128xf32>
    %4 = arith.mulf %2, %3 : vector<16x128xf32>
    %c0_3 = arith.constant 0 : index
    %c0_4 = arith.constant 0 : index
    %5 = vector.load %arg3[%c0_3, %c0_4] : memref<1x128xf32, #tpu.memory_space<vmem>>, vector<1x128xf32>
    %6 = vector.broadcast %5 : vector<1x128xf32> to vector<16x128xf32>
    %7 = arith.addf %4, %6 : vector<16x128xf32>
    %cst = arith.constant 0.000000e+00 : f32
    %8 = vector.broadcast %cst : f32 to vector<16x128xf32>
    %9 = arith.maximumf %7, %8 : vector<16x128xf32>
    %10 = arith.truncf %9 : vector<16x128xf32> to vector<16x128xbf16>
    %c0_5 = arith.constant 0 : index
    %c0_6 = arith.constant 0 : index
    %11 = vector.load %arg4[%c0_5, %c0_6] : memref<128x128xbf16, #tpu.memory_space<vmem>>, vector<128x128xbf16>
    %cst_7 = arith.constant dense<0.000000e+00> : vector<16x128xf32>
    %12 = tpu.matmul %10, %11, %cst_7 {dimension_numbers = #tpu.dot_dimension_numbers<[1], [0], [0], [1], [0, 0, 1, 1], [], []>} : vector<16x128xbf16>, vector<128x128xbf16>, vector<16x128xf32> -> vector<16x128xf32>
    %c0_8 = arith.constant 0 : index
    %c0_9 = arith.constant 0 : index
    %13 = vector.load %arg5[%c0_8, %c0_9] : memref<1x128xf32, #tpu.memory_space<vmem>>, vector<1x128xf32>
    %14 = vector.broadcast %13 : vector<1x128xf32> to vector<16x128xf32>
    %15 = arith.addf %12, %14 : vector<16x128xf32>
    %c0_10 = arith.constant 0 : index
    %c0_11 = arith.constant 0 : index
    %16 = vector.load %arg6[%c0_10, %c0_11] : memref<16x128xf32, #tpu.memory_space<vmem>>, vector<16x128xf32>
    tpu.vector_store %arg6[%c0_10, %c0_11], %15 {strides = array<i32>} : memref<16x128xf32, #tpu.memory_space<vmem>>, vector<16x128xf32>,
    return
  }
  func.func @transform_0(%arg0: i32) -> (i32, i32) {
    %c0_i32 = arith.constant 0 : i32
    %c0_i32_0 = arith.constant 0 : i32
    return %arg0, %c0_i32 : i32, i32
  }
  func.func @transform_1(%arg0: i32) -> (i32, i32) {
    %c0_i32 = arith.constant 0 : i32
    %c0_i32_0 = arith.constant 0 : i32
    %c0_i32_1 = arith.constant 0 : i32
    return %c0_i32, %c0_i32_0 : i32, i32
  }
  func.func @transform_2(%arg0: i32) -> (i32, i32) {
    %c0_i32 = arith.constant 0 : i32
    %c0_i32_0 = arith.constant 0 : i32
    %c0_i32_1 = arith.constant 0 : i32
    return %c0_i32, %c0_i32_0 : i32, i32
  }
  func.func @transform_3(%arg0: i32) -> (i32, i32) {
    %c0_i32 = arith.constant 0 : i32
    %c0_i32_0 = arith.constant 0 : i32
    %c0_i32_1 = arith.constant 0 : i32
    return %c0_i32, %c0_i32_0 : i32, i32
  }
  func.func @transform_4(%arg0: i32) -> (i32, i32) {
    %c0_i32 = arith.constant 0 : i32
    %c0_i32_0 = arith.constant 0 : i32
    %c0_i32_1 = arith.constant 0 : i32
    return %c0_i32, %c0_i32_0 : i32, i32
  }
  func.func @transform_5(%arg0: i32) -> (i32, i32) {
    %c0_i32 = arith.constant 0 : i32
    %c0_i32_0 = arith.constant 0 : i32
    return %arg0, %c0_i32 : i32, i32
  }
}

</mosaic_0001>

<llo_original>
// kernel: net_forward.1
$region0: #{net_forward.1}
  #allocation0 [shape = 'u32[]', space=smem, size = 0x4, offset = 0x4, fixed_abs, tag = 'smem constant byte address 0x4 - core index']
  #allocation1 [shape = 'u32[144,128]{1,0:T(1,128)}', space=vmem, size = 0x12000, scoped, tag = 'internal scratch']
  %s0 = inlined_call_operand.vmem [shape: f32[64,1], index: 0, kind: input, shape index: {}]
  %s1 = inlined_call_operand.vmem [shape: f32[1,128], index: 1, kind: input, shape index: {}]
  %s2 = inlined_call_operand.vmem [shape: f32[1,128], index: 2, kind: input, shape index: {}]
  %s3 = inlined_call_operand.vmem [shape: bf16[128,128], index: 3, kind: input, shape index: {}]
  %s4 = inlined_call_operand.vmem [shape: f32[1,128], index: 4, kind: input, shape index: {}]
  %s5 = inlined_call_operand.vmem [shape: f32[64,128], index: 5, kind: output, shape index: {}]
  %s6 = sld [smem:[#allocation0]]
  $region53: #{net_forward.1} parent=0
    _
  %s8 = ssub.s32 1, %s6
  %s9 = scalar_select 0, %s8, %s6
  loop: start=0, step=1, limit=6
  $region2: #{net_forward.1} parent=0 // loop_pre_header
    _
  $region3: #{net_forward.1} parent=0 // loop_header
    %s11 = sphi 0, %s15
    %p12 = scmp.ge.s32.totalorder %s11, 6
    %s21 = sphi 0, %s23
    %s24 = sphi 0, %s21
    %s25 = sphi 0, %s24
    %s41 = sphi 0, %s25
    %s45 = sphi 0, %s45
    %s47 = sphi 0, %s45
    %s48 = sphi 0, %s47
    %s62 = sphi 0, %s48
    %s66 = sphi 0, %s66
    %s68 = sphi 0, %s66
    %s69 = sphi 0, %s68
    %s83 = sphi 0, %s69
    %s87 = sphi 0, %s87
    %s89 = sphi 0, %s87
    %s90 = sphi 0, %s89
    %s104 = sphi 0, %s90
    %s108 = sphi 0, %s108
    %s110 = sphi 0, %s108
    %s111 = sphi 0, %s110
    %s125 = sphi 0, %s111
    %s131 = sphi 0, %s133
    %s134 = sphi 0, %s131
    %s135 = sphi 0, %s134
    %s151 = sphi 0, %s135
  $region4: #{net_forward.1} parent=0 // loop_header_branch
    %14 = sbr.rel (%p12) target = $region8
  $region5: #{net_forward.1} parent=0 // loop_body
    %s16 = ssub.s32 %s11, 1
    %s17 = ssub.s32 %s11, 2
    %s18 = sadd.s32 %s11, 1
    %s19 = ssub.s32 %s11, %s18
    %p20 = scmp.eq.s32.totalorder %s19, 0
    %s22 = sadd.s32 %s21, 1
    %s23 = scalar_select %p20, %s21, %s22
    %p26 = pneg %p20
    %p27 = scmp.eq.s32.totalorder %s11, 3
    %p28 = por %p26, %p27
    %p29 = scmp.ne.s32.totalorder %s21, %s24
    %p30 = scmp.eq.s32.totalorder %s11, 0
    %p31 = por %p29, %p30
    %p32 = scmp.ne.s32.totalorder %s21, %s24
    %p33 = scmp.eq.s32.totalorder %s16, 3
    %p34 = por %p32, %p33
    %p35 = scmp.ne.s32.totalorder %s24, %s25
    %p36 = scmp.eq.s32.totalorder %s16, 0
    %p37 = por %p35, %p36
    %p38 = scmp.ne.s32.totalorder %s24, %s25
    %p39 = scmp.eq.s32.totalorder %s17, 3
    %p40 = por %p38, %p39
    %p42 = scmp.ne.s32.totalorder %s25, %s41
    %p43 = scmp.eq.s32.totalorder %s17, 0
    %p44 = por %p42, %p43
    %s46 = sadd.s32 %s45, 1
    %p49 = scmp.eq.s32.totalorder %s11, 3
    %p50 = scmp.ne.s32.totalorder %s45, %s47
    %p51 = scmp.eq.s32.totalorder %s11, 0
    %p52 = por %p50, %p51
    %p53 = scmp.ne.s32.totalorder %s45, %s47
    %p54 = scmp.eq.s32.totalorder %s16, 3
    %p55 = por %p53, %p54
    %p56 = scmp.ne.s32.totalorder %s47, %s48
    %p57 = scmp.eq.s32.totalorder %s16, 0
    %p58 = por %p56, %p57
    %p59 = scmp.ne.s32.totalorder %s47, %s48
    %p60 = scmp.eq.s32.totalorder %s17, 3
    %p61 = por %p59, %p60
    %p63 = scmp.ne.s32.totalorder %s48, %s62
    %p64 = scmp.eq.s32.totalorder %s17, 0
    %p65 = por %p63, %p64
    %s67 = sadd.s32 %s66, 1
    %p70 = scmp.eq.s32.totalorder %s11, 3
    %p71 = scmp.ne.s32.totalorder %s66, %s68
    %p72 = scmp.eq.s32.totalorder %s11, 0
    %p73 = por %p71, %p72
    %p74 = scmp.ne.s32.totalorder %s66, %s68
    %p75 = scmp.eq.s32.totalorder %s16, 3
    %p76 = por %p74, %p75
    %p77 = scmp.ne.s32.totalorder %s68, %s69
    %p78 = scmp.eq.s32.totalorder %s16, 0
    %p79 = por %p77, %p78
    %p80 = scmp.ne.s32.totalorder %s68, %s69
    %p81 = scmp.eq.s32.totalorder %s17, 3
    %p82 = por %p80, %p81
    %p84 = scmp.ne.s32.totalorder %s69, %s83
    %p85 = scmp.eq.s32.totalorder %s17, 0
    %p86 = por %p84, %p85
    %s88 = sadd.s32 %s87, 1
    %p91 = scmp.eq.s32.totalorder %s11, 3
    %p92 = scmp.ne.s32.totalorder %s87, %s89
    %p93 = scmp.eq.s32.totalorder %s11, 0
    %p94 = por %p92, %p93
    %p95 = scmp.ne.s32.totalorder %s87, %s89
    %p96 = scmp.eq.s32.totalorder %s16, 3
    %p97 = por %p95, %p96
    %p98 = scmp.ne.s32.totalorder %s89, %s90
    %p99 = scmp.eq.s32.totalorder %s16, 0
    %p100 = por %p98, %p99
    %p101 = scmp.ne.s32.totalorder %s89, %s90
    %p102 = scmp.eq.s32.totalorder %s17, 3
    %p103 = por %p101, %p102
    %p105 = scmp.ne.s32.totalorder %s90, %s104
    %p106 = scmp.eq.s32.totalorder %s17, 0
    %p107 = por %p105, %p106
    %s109 = sadd.s32 %s108, 1
    %p112 = scmp.eq.s32.totalorder %s11, 3
    %p113 = scmp.ne.s32.totalorder %s108, %s110
    %p114 = scmp.eq.s32.totalorder %s11, 0
    %p115 = por %p113, %p114
    %p116 = scmp.ne.s32.totalorder %s108, %s110
    %p117 = scmp.eq.s32.totalorder %s16, 3
    %p118 = por %p116, %p117
    %p119 = scmp.ne.s32.totalorder %s110, %s111
    %p120 = scmp.eq.s32.totalorder %s16, 0
    %p121 = por %p119, %p120
    %p122 = scmp.ne.s32.totalorder %s110, %s111
    %p123 = scmp.eq.s32.totalorder %s17, 3
    %p124 = por %p122, %p123
    %p126 = scmp.ne.s32.totalorder %s111, %s125
    %p127 = scmp.eq.s32.totalorder %s17, 0
    %p128 = por %p126, %p127
    %s129 = ssub.s32 %s11, %s18
    %p130 = scmp.eq.s32.totalorder %s129, 0
    %s132 = sadd.s32 %s131, 1
    %s133 = scalar_select %p130, %s131, %s132
    %p136 = pneg %p130
    %p137 = scmp.eq.s32.totalorder %s11, 3
    %p138 = por %p136, %p137
    %p139 = scmp.ne.s32.totalorder %s131, %s134
    %p140 = scmp.eq.s32.totalorder %s11, 0
    %p141 = por %p139, %p140
    %p142 = scmp.ne.s32.totalorder %s131, %s134
    %p143 = scmp.eq.s32.totalorder %s16, 3
    %p144 = por %p142, %p143
    %p145 = scmp.ne.s32.totalorder %s134, %s135
    %p146 = scmp.eq.s32.totalorder %s16, 0
    %p147 = por %p145, %p146
    %p148 = scmp.ne.s32.totalorder %s134, %s135
    %p149 = scmp.eq.s32.totalorder %s17, 3
    %p150 = por %p148, %p149
    %p152 = scmp.ne.s32.totalorder %s135, %s151
    %p153 = scmp.eq.s32.totalorder %s17, 0
    %p154 = por %p152, %p153
    %p155 = scmp.le.s32.totalorder 1, %s11
    %p156 = scmp.lt.s32.totalorder %s11, 5
    %p157 = pnand %p155, %p156
    %p158 = pneg %p157
    // Predicated region
    $region9: #{net_forward.1} parent=5 // pred_check
      _
    $region10: #{net_forward.1} parent=5 // pred_check_branch
      %160 = sbr.rel (%p157) target = $region12
    $region11: #{net_forward.1} parent=5 // pred_region
      %s161 = ssub.s32 %s11, 1
      // Predicated region
      $region13: #{net_forward.1} parent=11 // pred_check
        %p162 = pneg %p58
      $region14: #{net_forward.1} parent=11 // pred_check_branch
        %164 = sbr.rel (%p162) target = $region16
      $region15: #{net_forward.1} parent=11 // pred_region
        _
      $region16: #{net_forward.1} parent=11 // pred_fallthru
        _
      // Predicated region
      $region17: #{net_forward.1} parent=11 // pred_check
        %p165 = pneg %p79
      $region18: #{net_forward.1} parent=11 // pred_check_branch
        %167 = sbr.rel (%p165) target = $region20
      $region19: #{net_forward.1} parent=11 // pred_region
        _
      $region20: #{net_forward.1} parent=11 // pred_fallthru
        _
      // Predicated region
      $region21: #{net_forward.1} parent=11 // pred_check
        %p168 = pneg %p100
      $region22: #{net_forward.1} parent=11 // pred_check_branch
        %170 = sbr.rel (%p168) target = $region24
      $region23: #{net_forward.1} parent=11 // pred_region
        _
      $region24: #{net_forward.1} parent=11 // pred_fallthru
        _
      // Predicated region
      $region25: #{net_forward.1} parent=11 // pred_check
        %p171 = pneg %p121
      $region26: #{net_forward.1} parent=11 // pred_check_branch
        %173 = sbr.rel (%p171) target = $region28
      $region27: #{net_forward.1} parent=11 // pred_region
        _
      $region28: #{net_forward.1} parent=11 // pred_fallthru
        _
    $region12: #{net_forward.1} parent=5 // pred_fallthru
      _
    %p174 = scmp.lt.s32.totalorder %s11, 4
    // Predicated region
    $region29: #{net_forward.1} parent=5 // pred_check
      %p175 = pneg %p174
    $region30: #{net_forward.1} parent=5 // pred_check_branch
      %177 = sbr.rel (%p175) target = $region32
    $region31: #{net_forward.1} parent=5 // pred_region
      // Predicated region
      $region33: #{net_forward.1} parent=31 // pred_check
        %p178 = pneg %p31
      $region34: #{net_forward.1} parent=31 // pred_check_branch
        %180 = sbr.rel (%p178) target = $region36
      $region35: #{net_forward.1} parent=31 // pred_region
        %s181 = smul.u32 2, %s11
        %p182 = scmp.lt.s32.totalorder %s181, 7
        %s183 = scalar_select %p182, %s181, 7
        %s184 = smul.addr %s183, 8
        %s185 = scalar_lea.vmem %s0, %s184
        %s186 = smul.u32 2, %s11
      $region36: #{net_forward.1} parent=31 // pred_fallthru
        _
    $region32: #{net_forward.1} parent=5 // pred_fallthru
      _
    %p187 = scmp.le.s32.totalorder 1, %s11
    %p188 = scmp.lt.s32.totalorder %s11, 5
    %p189 = pnand %p187, %p188
    %p190 = pneg %p189
    // Predicated region
    $region37: #{net_forward.1} parent=5 // pred_check
      _
    $region38: #{net_forward.1} parent=5 // pred_check_branch
      %192 = sbr.rel (%p189) target = $region40
    $region39: #{net_forward.1} parent=5 // pred_region
      %s193 = ssub.s32 %s11, 1
      %s194 = smul.u32 2, %s16
      %p195 = scmp.lt.s32.totalorder %s194, 7
      %s196 = scalar_select %p195, %s194, 7
      %s197 = smul.addr %s196, 8
      %s198 = scalar_lea.vmem %s0, %s197
      %p199 = pneg %p37
      %p200 = pneg %p34
      %p201 = pneg %p58
      %p202 = pneg %p55
      %p203 = pneg %p79
      %p204 = pneg %p76
      %p205 = pneg %p100
      %p206 = pneg %p97
      %p207 = pneg %p121
      %p208 = pneg %p118
      %p209 = pneg %p147
      %p210 = pneg %p144
      %s211 = smul.u32 2, %s16
      %p212 = scmp.lt.s32.totalorder %s211, 7
      %s213 = scalar_select %p212, %s211, 7
      %s214 = smul.addr %s213, 8
      %s215 = scalar_lea.vmem %s5, %s214
      %s216 = smul.u32 2, %s16
      %p217 = scmp.lt.s32.totalorder %s216, 7
      %s218 = scalar_select %p217, %s216, 7
      %s219 = smul.addr %s218, 8
      %s220 = scalar_lea.vmem %s0, %s219
      %s221 = smul.u32 2, %s16
      %s222 = smul.u32 2, %s16
      %p223 = scmp.lt.s32.totalorder %s222, 7
      %s224 = scalar_select %p223, %s222, 7
      %s225 = smul.addr %s224, 8
      %s226 = scalar_lea.vmem %s5, %s225
      %s227 = smul.u32 2, %s16
      %v229 = vld [vmem:[%s220] sm:$0xff]
      %v230 = vld [vmem:[%s220 + $0x8] sm:$0xff]
      %v231 = vld [vmem:[%s1] sm:$0x1]
      %233 = vset.pattern.permute.xlu0 0
      %234 = vperm.xlu0 %233, %v229
      %v235 = vpop.permute.xlu0 %234
      %238 = vset.pattern.permute.xlu0 0
      %239 = vperm.xlu0 %238, %v230
      %v240 = vpop.permute.xlu0 %239
      %v243 = vlaneseq
      %v244 = vshrl.u32 %v243, 7
      %v245 = vsub.s32 0, %v244
      %v246 = vrot.slane %v231, %v245
      %v248 = vmul.f32 %v235, %v246
      %v249 = vmul.f32 %v240, %v246
      %v250 = vld [vmem:[%s2] sm:$0x1]
      %v252 = vlaneseq
      %v253 = vshrl.u32 %v252, 7
      %v254 = vsub.s32 0, %v253
      %v255 = vrot.slane %v250, %v254
      %v257 = vadd.f32 %v248, %v255
      %v258 = vadd.f32 %v249, %v255
      %v259 = vmax.f32 %v257, 0.0
      %v260 = vmax.f32 %v258, 0.0
      %v261 = vpack.c.bf16 %v260, %v259
      %v262 = vld [vmem:[%s3] sm:$0xf]
      %v263 = vld [vmem:[%s3 + $0x4] sm:$0xf]
      %v264 = vld [vmem:[%s3 + $0x8] sm:$0xf]
      %v265 = vld [vmem:[%s3 + $0xc] sm:$0xf]
      %v266 = vld [vmem:[%s3 + $0x10] sm:$0xf]
      %v267 = vld [vmem:[%s3 + $0x14] sm:$0xf]
      %v268 = vld [vmem:[%s3 + $0x18] sm:$0xf]
      %v269 = vld [vmem:[%s3 + $0x1c] sm:$0xf]
      %v270 = vld [vmem:[%s3 + $0x20] sm:$0xf]
      %v271 = vld [vmem:[%s3 + $0x24] sm:$0xf]
      %v272 = vld [vmem:[%s3 + $0x28] sm:$0xf]
      %v273 = vld [vmem:[%s3 + $0x2c] sm:$0xf]
      %v274 = vld [vmem:[%s3 + $0x30] sm:$0xf]
      %v275 = vld [vmem:[%s3 + $0x34] sm:$0xf]
      %v276 = vld [vmem:[%s3 + $0x38] sm:$0xf]
      %v277 = vld [vmem:[%s3 + $0x3c] sm:$0xf]
      %v278 = vld [vmem:[%s4] sm:$0x1]
      %v280 = vlaneseq
      %v281 = vshrl.u32 %v280, 7
      %v282 = vsub.s32 0, %v281
      %v283 = vrot.slane %v278, %v282
      %v301 = vunpack.c.l.b16 %v262
      %v302 = vunpack.c.l.b16 %v263
      %v303 = vunpack.c.l.b16 %v264
      %v304 = vunpack.c.l.b16 %v265
      %v305 = vunpack.c.l.b16 %v266
      %v306 = vunpack.c.l.b16 %v267
      %v307 = vunpack.c.l.b16 %v268
      %v308 = vunpack.c.l.b16 %v269
      %v309 = vunpack.c.l.b16 %v270
      %v310 = vunpack.c.l.b16 %v271
      %v311 = vunpack.c.l.b16 %v272
      %v312 = vunpack.c.l.b16 %v273
      %v313 = vunpack.c.l.b16 %v274
      %v314 = vunpack.c.l.b16 %v275
      %v315 = vunpack.c.l.b16 %v276
      %v316 = vunpack.c.l.b16 %v277
      %v317 = vpack.c.b16 %v302, %v301
      %v318 = vpack.c.b16 %v304, %v303
      %v319 = vpack.c.b16 %v306, %v305
      %v320 = vpack.c.b16 %v308, %v307
      %v321 = vpack.c.b16 %v310, %v309
      %v322 = vpack.c.b16 %v312, %v311
      %v323 = vpack.c.b16 %v314, %v313
      %v324 = vpack.c.b16 %v316, %v315
      %333 = vmatprep.subr.bf16.mxu0 0
      %334 = vmatpush1.bf16.msra.mxu0 %v317
      %335 = vmatprep.subr.bf16.mxu0 0
      %336 = vmatpush1.bf16.msra.mxu0 %v318
      %337 = vmatprep.subr.bf16.mxu0 0
      %338 = vmatpush1.bf16.msra.mxu0 %v319
      %339 = vmatprep.subr.bf16.mxu0 0
      %340 = vmatpush1.bf16.msra.mxu0 %v320
      %341 = vmatprep.subr.bf16.mxu0 0
      %342 = vmatpush1.bf16.msra.mxu0 %v321
      %343 = vmatprep.subr.bf16.mxu0 0
      %344 = vmatpush1.bf16.msra.mxu0 %v322
      %345 = vmatprep.subr.bf16.mxu0 0
      %346 = vmatpush1.bf16.msra.mxu0 %v323
      %347 = vmatprep.subr.bf16.mxu0 0
      %348 = vmatpush1.bf16.msra.mxu0 %v324
      %349 = vmatprep.subr.bf16.mxu0 0
      %350 = vmatpush1.bf16.msra.mxu0 0
      %351 = vmatprep.subr.bf16.mxu0 0
      %352 = vmatpush1.bf16.msra.mxu0 0
      %353 = vmatprep.subr.bf16.mxu0 0
      %354 = vmatpush1.bf16.msra.mxu0 0
      %355 = vmatprep.subr.bf16.mxu0 0
      %356 = vmatpush1.bf16.msra.mxu0 0
      %357 = vmatprep.subr.bf16.mxu0 0
      %358 = vmatpush1.bf16.msra.mxu0 0
      %359 = vmatprep.subr.bf16.mxu0 0
      %360 = vmatpush1.bf16.msra.mxu0 0
      %361 = vmatprep.subr.bf16.mxu0 0
      %362 = vmatpush1.bf16.msra.mxu0 0
      %363 = vmatprep.subr.bf16.mxu0 0
      %364 = vmatpush1.bf16.msra.mxu0 0
      %365 = vmatprep.mubr.bf16.mxu0 0
      %366 = vmatmul.mubr.bf16.gmra.mrb[0].mxu0 %v261
      %v367 = vpop.f32.mrb[0].mxu0
      %v368 = vadd.f32 %v283, %v367
      %v369 = vpop.f32.mrb[0].mxu0
      %v370 = vpop.f32.mrb[0].mxu0
      %v371 = vadd.f32 %v283, %v370
      %v372 = vpop.f32.mrb[0].mxu0
      %373 = vdwg.mxu0
      %374 = vst [vmem:[%s226] sm:$0xff] %v368
      %375 = vst [vmem:[%s226 + $0x8] sm:$0xff] %v371
      %s376 = smul.u32 2, %s16
      %p377 = scmp.lt.s32.totalorder %s376, 7
      %s378 = scalar_select %p377, %s376, 7
      %s379 = smul.addr %s378, 8
      %s380 = scalar_lea.vmem %s5, %s379
      // Predicated region
      $region41: #{net_forward.1} parent=39 // pred_check
        %p381 = pneg %p144
      $region42: #{net_forward.1} parent=39 // pred_check_branch
        %383 = sbr.rel (%p381) target = $region44
      $region43: #{net_forward.1} parent=39 // pred_region
        %s384 = smul.u32 2, %s16
      $region44: #{net_forward.1} parent=39 // pred_fallthru
        _
    $region40: #{net_forward.1} parent=5 // pred_fallthru
      _
    %p385 = scmp.le.s32.totalorder 2, %s11
    // Predicated region
    $region45: #{net_forward.1} parent=5 // pred_check
      %p386 = pneg %p385
    $region46: #{net_forward.1} parent=5 // pred_check_branch
      %388 = sbr.rel (%p386) target = $region48
    $region47: #{net_forward.1} parent=5 // pred_region
      %s389 = ssub.s32 %s11, 2
      // Predicated region
      $region49: #{net_forward.1} parent=47 // pred_check
        %p390 = pneg %p150
      $region50: #{net_forward.1} parent=47 // pred_check_branch
        %392 = sbr.rel (%p390) target = $region52
      $region51: #{net_forward.1} parent=47 // pred_region
        %s393 = smul.u32 2, %s17
        %p394 = scmp.lt.s32.totalorder %s393, 7
        %s395 = scalar_select %p394, %s393, 7
        %s396 = smul.addr %s395, 8
        %s397 = scalar_lea.vmem %s5, %s396
      $region52: #{net_forward.1} parent=47 // pred_fallthru
        _
    $region48: #{net_forward.1} parent=5 // pred_fallthru
      _
  $region6: #{net_forward.1} parent=0 // loop_footer
    %s15 = sadd.s32 1, %s11
  $region7: #{net_forward.1} parent=0 // loop_footer_branch
    %10 = sbr.rel target = $region3
  $region8: #{net_forward.1} parent=0 // loop_exit
    _

</llo_original>
